<compile_context>
chip_gen: v7x
topology: tpu7x:2x2x1
jax: 0.10.0
libtpu: 0.0.40
codegen_flags: <defaults>
</compile_context>

<pallas_src>
import functools

import jax
import jax.numpy as jnp
from jax.experimental import pallas as pl
from jax.experimental.pallas import tpu as pltpu

LANE = 128
SUBLANE = 8
MIN_TILE = 512  # lanes; measured HBM-roofline fraction: 128->~29%, 512->~85%


def _round_up(x: int, m: int) -> int:
    return (x + m - 1) // m * m


def _tpu_vmem_info():
    """(physical VMEM bytes, whether the query succeeded)."""
    try:
        info = pltpu.get_tpu_info()
        cap = getattr(info, "vmem_capacity_bytes", None)
        if cap:
            return int(cap), True
    except Exception:
        pass
    return 64 * 1024 * 1024, False  # conservative: fits every generation


def _gates_from_pooled(z, w_sq, w_ex):
    """sigmoid(W_ex @ (W_sq @ z)) for a pooled channel vector z of shape (C,).

    Broadcast-multiply + lane reduction (VPU/XLU) so the tiny (C, 1) matvecs
    never hit the MXU with N=1.
    """
    z1 = jnp.sum(w_sq * z[None, :], axis=1)    # (C//2,)  == W_sq @ z
    z2 = jnp.sum(w_ex * z1[None, :], axis=1)   # (C,)     == W_ex @ z1
    return jax.nn.sigmoid(z2)                  # (C,)


# ---------------------- fused path: one grid step per image ------------------

def _cse_fused_kernel(u_ref, w_sq_ref, w_ex_ref, o_ref, *, inv_hw):
    # u_ref: (C, HW) at the I/O dtype.  Cast per use (no full-tile f32 temp):
    # one streamed read for the pooled sum, a second streamed read for the
    # scaled output.
    z = jnp.sum(u_ref[...].astype(jnp.float32), axis=1) * inv_hw        # (C,)
    s = _gates_from_pooled(z, w_sq_ref[...], w_ex_ref[...])             # (C,)
    o_ref[...] = (u_ref[...].astype(jnp.float32) * s[:, None]).astype(o_ref.dtype)


# ---------------------- tiled two-pass path ----------------------------------

def _partial_sum_kernel(u_ref, p_ref, *, hw, tile, need_mask):
    # u_ref: (C, tile) io dtype.  p_ref: (8, C) f32 partial-sum slab for this
    # (b, t) grid step (row 0 holds the sum; 8 sublanes keep the block legal).
    u = u_ref[...].astype(jnp.float32)
    if need_mask:
        # Ragged last tile: zero the lanes past the true HW before summing
        # (out-of-bounds block reads are unspecified).
        t = pl.program_id(1)
        col = t * tile + jax.lax.broadcasted_iota(jnp.int32, u.shape, 1)
        u = jnp.where(col < hw, u, 0.0)
    part = jnp.sum(u, axis=1)                                           # (C,)
    p_ref[...] = jnp.broadcast_to(part[None, :], p_ref.shape)


def _scale_kernel(g_ref, u_ref, o_ref):
    s = g_ref[0]                                                        # (C,) f32 gates
    # Cast per use; out-of-bounds lanes of a ragged last tile are dropped by
    # the clamped block store.
    o_ref[...] = (u_ref[...].astype(jnp.float32) * s[:, None]).astype(o_ref.dtype)


# ---------------------- wrapper ----------------------------------------------

def cse_forward(x_nchw, w_squeeze, w_excite, *,
                vmem_budget_bytes=None, force_tiled=False, spatial_tile=None):
    """cSE forward.  x_nchw: (B, C, H, W); w_squeeze: (C//2, C); w_excite: (C, C//2).

    I/O runs at x_nchw.dtype (pass bf16 to halve HBM traffic); internal compute
    is f32.  Output dtype == input dtype.
    """
    B, C, H, W = x_nchw.shape
    C2 = w_squeeze.shape[0]
    assert w_squeeze.shape == (C2, C) and w_excite.shape == (C, C2)
    HW = H * W
    io_dtype = x_nchw.dtype
    isz = jnp.dtype(io_dtype).itemsize

    w_sq = w_squeeze.astype(jnp.float32)
    w_ex = w_excite.astype(jnp.float32)
    inv_hw = 1.0 / float(HW)

    x = x_nchw.reshape(B, C, HW)   # no host-side padding; kernels handle ragged HW

    # Generation-aware VMEM budget (≈56 MiB on 64-MiB parts, ≈112 MiB on
    # 128-MiB parts); always clamp the Mosaic limit below physical VMEM.
    phys_vmem, vmem_known = _tpu_vmem_info()
    headroom = (8 << 20) if phys_vmem <= (64 << 20) else (16 << 20)
    auto_budget = phys_vmem - headroom
    budget = auto_budget if vmem_budget_bytes is None else min(int(vmem_budget_bytes), auto_budget)
    vmem_limit = int(max(budget, 32 << 20))            # still <= auto_budget <= physical

    # VMEM footprint of one whole-image (C, HW) block at the I/O dtype, using
    # the padded in-VMEM shape (sublane packing depends on dtype width).
    HW128 = _round_up(HW, LANE)
    c_pad = _round_up(C, max(SUBLANE, 32 // isz))
    block_bytes = c_pad * HW128 * isz
    w_bytes = 2 * (_round_up(C2, 8) * _round_up(C, LANE)
                   + _round_up(C, 8) * _round_up(C2, LANE)) * 4
    slack = 2 << 20                                    # Mosaic scratch + tiny f32 temps
    fused_need_double = 2 * 2 * block_bytes + w_bytes + slack   # in+out, double-buffered
    fused_need_single = 2 * 1 * block_bytes + w_bytes + slack   # in+out, single-buffered

    # B==1 on a likely-two-TensorCore part (v7x): the fused grid has a single
    # step and runs on one core; the fully parallel tiled path engages both and
    # wins despite its 1.5x HBM traffic.
    likely_two_tc = vmem_known and phys_vmem <= (64 << 20)
    prefer_tiled_small_batch = likely_two_tc and B < 2 and HW >= 2 * MIN_TILE

    use_fused = (not force_tiled and not prefer_tiled_small_batch
                 and fused_need_single <= budget)

    if use_fused:
        single_buffer = fused_need_double > budget
        xo_kwargs = {"pipeline_mode": pl.Buffered(1)} if single_buffer else {}
        idx = lambda b: (b, 0, 0)
        x_spec = pl.BlockSpec((pl.Squeezed(), C, HW), idx, **xo_kwargs)
        o_spec = pl.BlockSpec((pl.Squeezed(), C, HW), idx, **xo_kwargs)
        cost = pl.CostEstimate(
            flops=3 * B * C * HW + 4 * B * C * C2,
            transcendentals=B * C,
            bytes_accessed=2 * B * C * HW * isz + 2 * C * C2 * 4)
        out = pl.pallas_call(
            functools.partial(_cse_fused_kernel, inv_hw=inv_hw),
            out_shape=jax.ShapeDtypeStruct((B, C, HW), io_dtype),
            grid_spec=pltpu.PrefetchScalarGridSpec(
                num_scalar_prefetch=0,
                grid=(B,),
                in_specs=[
                    x_spec,
                    pl.BlockSpec((C2, C), lambda b: (0, 0)),
                    pl.BlockSpec((C, C2), lambda b: (0, 0)),
                ],
                out_specs=o_spec,
            ),
            compiler_params=pltpu.CompilerParams(
                dimension_semantics=("parallel",),
                vmem_limit_bytes=vmem_limit),
            cost_estimate=cost,
        )(x, w_sq, w_ex)
        return out.reshape(B, C, H, W)

    # ---- Tiled two-pass path (image doesn't fit VMEM, or small-batch v7x). --
    if spatial_tile is None:
        per_col = 4 * c_pad * isz                      # in+out blocks, double-buffered
        cap_cols = max(budget - w_bytes - slack, 0) // per_col
        thw = (cap_cols // LANE) * LANE
        thw = min(HW128, max(MIN_TILE, thw))           # >= 512-lane tiles for roofline
        thw = max(thw, LANE)
    else:
        thw = int(spatial_tile)
        assert thw % LANE == 0, "spatial tile must be a multiple of 128 lanes"
    n_t = int(pl.cdiv(HW, thw))
    need_mask = (HW % thw) != 0

    # Pass A: per-(b, t) partial channel sums; both grid axes parallel so a
    # two-TensorCore chip splits the spatial axis even when B == 1.
    cost_a = pl.CostEstimate(
        flops=B * C * HW, transcendentals=0,
        bytes_accessed=B * C * HW * isz + B * n_t * 8 * C * 4)
    partials = pl.pallas_call(
        functools.partial(_partial_sum_kernel, hw=HW, tile=thw, need_mask=need_mask),
        out_shape=jax.ShapeDtypeStruct((B, n_t * 8, C), jnp.float32),
        grid_spec=pltpu.PrefetchScalarGridSpec(
            num_scalar_prefetch=0,
            grid=(B, n_t),
            in_specs=[pl.BlockSpec((pl.Squeezed(), C, thw), lambda b, t: (b, 0, t))],
            out_specs=pl.BlockSpec((pl.Squeezed(), 8, C), lambda b, t: (b, t, 0)),
        ),
        compiler_params=pltpu.CompilerParams(
            dimension_semantics=("parallel", "parallel"),
            vmem_limit_bytes=vmem_limit),
        cost_estimate=cost_a,
    )(x)

    # Tiny mean -> squeeze -> excite -> sigmoid in plain JAX (B*C scalars).
    z = partials.reshape(B, n_t, 8, C)[:, :, 0, :].sum(axis=1) * inv_hw      # (B, C)
    z1 = jnp.einsum("oc,bc->bo", w_sq, z)
    z2 = jnp.einsum("oc,bc->bo", w_ex, z1)
    gates = jax.nn.sigmoid(z2).astype(jnp.float32)[:, None, :]               # (B, 1, C)

    # Pass B: scale each spatial tile by its per-channel gate.
    cost_b = pl.CostEstimate(
        flops=2 * B * C * HW, transcendentals=0,
        bytes_accessed=2 * B * C * HW * isz + B * C * 4)
    out = pl.pallas_call(
        _scale_kernel,
        out_shape=jax.ShapeDtypeStruct((B, C, HW), io_dtype),
        grid_spec=pltpu.PrefetchScalarGridSpec(
            num_scalar_prefetch=0,
            grid=(B, n_t),
            in_specs=[
                pl.BlockSpec((pl.Squeezed(), 1, C), lambda b, t: (b, 0, 0)),
                pl.BlockSpec((pl.Squeezed(), C, thw), lambda b, t: (b, 0, t)),
            ],
            out_specs=pl.BlockSpec((pl.Squeezed(), C, thw), lambda b, t: (b, 0, t)),
        ),
        compiler_params=pltpu.CompilerParams(
            dimension_semantics=("parallel", "parallel"),
            vmem_limit_bytes=vmem_limit),
        cost_estimate=cost_b,
    )(gates, x)

    return out.reshape(B, C, H, W)


def cse_reference(x_nchw, w_squeeze, w_excite):
    """Pure-JAX reference matching the PyTorch module semantics (f32 compute)."""
    xf = x_nchw.astype(jnp.float32)
    z = jnp.mean(xf, axis=(2, 3))                            # (B, C)
    z1 = jnp.einsum("oc,bc->bo", w_squeeze, z)               # (B, C//2)
    z2 = jnp.einsum("oc,bc->bo", w_excite, z1)               # (B, C)
    s = jax.nn.sigmoid(z2)[:, :, None, None]                 # (B, C, 1, 1)
    return xf * s


if __name__ == "__main__":
    key = jax.random.PRNGKey(0)
    kx, k1, k2, kx2 = jax.random.split(key, 4)

    B, C, H, W = 2, 4, 16, 16
    x = jax.random.normal(kx, (B, C, H, W), dtype=jnp.float32)
    # Conv2d(C, C//2, k=1, bias=False) weight (C//2, C, 1, 1) -> (C//2, C)
    w_squeeze = 0.1 * jax.random.normal(k1, (C // 2, C), dtype=jnp.float32)
    # Conv2d(C//2, C, k=1, bias=False) weight (C, C//2, 1, 1) -> (C, C//2)
    w_excite = 0.1 * jax.random.normal(k2, (C, C // 2), dtype=jnp.float32)

    ref = cse_reference(x, w_squeeze, w_excite)

    # 1) fused path, f32 I/O (exact module semantics).
    out = jax.block_until_ready(cse_forward(x, w_squeeze, w_excite))
    assert out.dtype == x.dtype
    assert jnp.allclose(out, ref, atol=1e-5, rtol=1e-5), "fused f32 mismatch"

    # 2) fused path, bf16 HBM I/O (half the memory traffic; compute stays f32).
    x_bf = x.astype(jnp.bfloat16)
    out_bf = jax.block_until_ready(cse_forward(x_bf, w_squeeze, w_excite))
    ref_bf = cse_reference(x_bf, w_squeeze, w_excite)
    assert out_bf.dtype == jnp.bfloat16
    assert jnp.allclose(out_bf.astype(jnp.float32), ref_bf,
                        atol=2e-2, rtol=2e-2), "fused bf16 mismatch"

    # 3) forced tiled two-pass path (128-lane tiles, divisible spatial size).
    out_t = jax.block_until_ready(
        cse_forward(x, w_squeeze, w_excite, force_tiled=True, spatial_tile=128))
    assert jnp.allclose(out_t, ref, atol=1e-5, rtol=1e-5), "tiled mismatch"

    # 4) ragged spatial size (HW=100, not a multiple of 128): no host-side pad
    #    or slice on either path.
    H2 = W2 = 10
    x2 = jax.random.normal(kx2, (B, C, H2, W2), dtype=jnp.float32)
    ref2 = cse_reference(x2, w_squeeze, w_excite)
    out2 = jax.block_until_ready(cse_forward(x2, w_squeeze, w_excite))
    assert jnp.allclose(out2, ref2, atol=1e-5, rtol=1e-5), "fused ragged mismatch"
    out2_t = jax.block_until_ready(
        cse_forward(x2, w_squeeze, w_excite, force_tiled=True, spatial_tile=128))
    assert jnp.allclose(out2_t, ref2, atol=1e-5, rtol=1e-5), "tiled ragged mismatch"

    print("KERNEL_OK")
</pallas_src>

<mosaic_0001>
module attributes {stable_mosaic.version = 11 : i64} {
  func.func @_cse_fused_kernel(%arg0: i32, %arg1: memref<1x4x256xf32, #tpu.memory_space<vmem>>, %arg2: memref<2x4xf32, #tpu.memory_space<vmem>>, %arg3: memref<4x2xf32, #tpu.memory_space<vmem>>, %arg4: memref<1x4x256xf32, #tpu.memory_space<vmem>>) attributes {dimension_semantics = [#tpu.dimension_semantics<parallel>], iteration_bounds = array<i64: 2>, scalar_prefetch = 0 : i64, scratch_operands = 0 : i64, tpu.core_type = #tpu.core_type<tc>, window_params = [{transform_indices = @transform_0, window_bounds = array<i64: 1, 4, 256>}, {pipeline_mode = #tpu.pipeline_mode<synchronous>, transform_indices = @transform_1, window_bounds = array<i64: 2, 4>}, {pipeline_mode = #tpu.pipeline_mode<synchronous>, transform_indices = @transform_2, window_bounds = array<i64: 4, 2>}, {transform_indices = @transform_3, window_bounds = array<i64: 1, 4, 256>}]} {
    %c0 = arith.constant 0 : index
    %c0_0 = arith.constant 0 : index
    %c0_1 = arith.constant 0 : index
    %0 = vector.load %arg1[%c0, %c0_0, %c0_1] : memref<1x4x256xf32, #tpu.memory_space<vmem>>, vector<1x4x256xf32>
    %1 = vector.shape_cast %0 : vector<1x4x256xf32> to vector<4x256xf32>
    %cst = arith.constant dense<0.000000e+00> : vector<4xf32>
    %2 = vector.multi_reduction <add>, %1, %cst [1] : vector<4x256xf32> to vector<4xf32>
    %cst_2 = arith.constant 3.906250e-03 : f32
    %3 = vector.broadcast %cst_2 : f32 to vector<4xf32>
    %4 = arith.mulf %2, %3 : vector<4xf32>
    %c0_3 = arith.constant 0 : index
    %c0_4 = arith.constant 0 : index
    %5 = vector.load %arg2[%c0_3, %c0_4] : memref<2x4xf32, #tpu.memory_space<vmem>>, vector<2x4xf32>
    %c0_5 = arith.constant 0 : index
    %c0_6 = arith.constant 0 : index
    %6 = vector.load %arg3[%c0_5, %c0_6] : memref<4x2xf32, #tpu.memory_space<vmem>>, vector<4x2xf32>
    %7 = vector.shape_cast %4 : vector<4xf32> to vector<1x4xf32>
    %8 = vector.broadcast %7 : vector<1x4xf32> to vector<2x4xf32>
    %9 = arith.mulf %5, %8 : vector<2x4xf32>
    %cst_7 = arith.constant dense<0.000000e+00> : vector<2xf32>
    %10 = vector.multi_reduction <add>, %9, %cst_7 [1] : vector<2x4xf32> to vector<2xf32>
    %11 = vector.shape_cast %10 : vector<2xf32> to vector<1x2xf32>
    %12 = vector.broadcast %11 : vector<1x2xf32> to vector<4x2xf32>
    %13 = arith.mulf %6, %12 : vector<4x2xf32>
    %cst_8 = arith.constant dense<0.000000e+00> : vector<4xf32>
    %14 = vector.multi_reduction <add>, %13, %cst_8 [1] : vector<4x2xf32> to vector<4xf32>
    %15 = arith.negf %14 : vector<4xf32>
    %16 = math.exp %15 : vector<4xf32>
    %cst_9 = arith.constant 1.000000e+00 : f32
    %17 = vector.broadcast %cst_9 : f32 to vector<4xf32>
    %18 = arith.addf %17, %16 : vector<4xf32>
    %19 = arith.divf %17, %18 : vector<4xf32>
    %c0_10 = arith.constant 0 : index
    %c0_11 = arith.constant 0 : index
    %c0_12 = arith.constant 0 : index
    %20 = vector.load %arg1[%c0_10, %c0_11, %c0_12] : memref<1x4x256xf32, #tpu.memory_space<vmem>>, vector<1x4x256xf32>
    %21 = vector.shape_cast %20 : vector<1x4x256xf32> to vector<4x256xf32>
    %22 = vector.shape_cast %19 : vector<4xf32> to vector<4x1xf32>
    %23 = vector.broadcast %22 : vector<4x1xf32> to vector<4x256xf32>
    %24 = arith.mulf %21, %23 : vector<4x256xf32>
    %c0_13 = arith.constant 0 : index
    %c0_14 = arith.constant 0 : index
    %c0_15 = arith.constant 0 : index
    %25 = vector.load %arg4[%c0_13, %c0_14, %c0_15] : memref<1x4x256xf32, #tpu.memory_space<vmem>>, vector<1x4x256xf32>
    %26 = vector.shape_cast %25 : vector<1x4x256xf32> to vector<4x256xf32>
    %27 = vector.shape_cast %24 : vector<4x256xf32> to vector<1x4x256xf32>
    tpu.vector_store %arg4[%c0_13, %c0_14, %c0_15], %27 {strides = array<i32>} : memref<1x4x256xf32, #tpu.memory_space<vmem>>, vector<1x4x256xf32>,
    return
  }
  func.func @transform_0(%arg0: i32) -> (i32, i32, i32) {
    %c0_i32 = arith.constant 0 : i32
    %c0_i32_0 = arith.constant 0 : i32
    %c0_i32_1 = arith.constant 0 : i32
    return %arg0, %c0_i32, %c0_i32_0 : i32, i32, i32
  }
  func.func @transform_1(%arg0: i32) -> (i32, i32) {
    %c0_i32 = arith.constant 0 : i32
    %c0_i32_0 = arith.constant 0 : i32
    %c0_i32_1 = arith.constant 0 : i32
    return %c0_i32, %c0_i32_0 : i32, i32
  }
  func.func @transform_2(%arg0: i32) -> (i32, i32) {
    %c0_i32 = arith.constant 0 : i32
    %c0_i32_0 = arith.constant 0 : i32
    %c0_i32_1 = arith.constant 0 : i32
    return %c0_i32, %c0_i32_0 : i32, i32
  }
  func.func @transform_3(%arg0: i32) -> (i32, i32, i32) {
    %c0_i32 = arith.constant 0 : i32
    %c0_i32_0 = arith.constant 0 : i32
    %c0_i32_1 = arith.constant 0 : i32
    return %arg0, %c0_i32, %c0_i32_0 : i32, i32, i32
  }
}

</mosaic_0001>

<llo_original>
// kernel: tpu_custom_call.1
$region0: #{tpu_custom_call.1}
  #allocation0 [shape = 'u32[]', space=smem, size = 0x4, offset = 0x4, fixed_abs, tag = 'smem constant byte address 0x4 - core index']
  #allocation1 [shape = 'u32[144,128]{1,0:T(1,128)}', space=vmem, size = 0x12000, scoped, tag = 'internal scratch']
  %s0 = inlined_call_operand.hbm [shape: f32[2,4,256], index: 0, kind: input, shape index: {}]
  %s1 = inlined_call_operand.vmem [shape: f32[2,4], index: 1, kind: input, shape index: {}]
  %s2 = inlined_call_operand.vmem [shape: f32[4,2], index: 2, kind: input, shape index: {}]
  %s3 = inlined_call_operand.hbm [shape: f32[2,4,256], index: 3, kind: output, shape index: {}]
  %s4 = sld [smem:[#allocation0]]
  $region49: #{tpu_custom_call.1} parent=0
    _
  %s6 = ssub.s32 1, %s4
  %s7 = scalar_select 0, %s6, %s4
  $region1: #{tpu_custom_call.1} parent=0
    #allocation2 [shape = 'u8[8192]{0}', space=vmem, size = 0x2000, scoped, tag = 'input window, operand 0']
    #allocation3 [shape = 's32[2]{0}', space=sflag, size = 0x8, scoped, tag = 'scoped memory for tpu_custom_call.1']
    #allocation4 [shape = 's32[2]{0}', space=sflag, size = 0x8, scoped, tag = 'scoped memory for tpu_custom_call.1']
    #allocation5 [shape = 'u8[8192]{0}', space=vmem, size = 0x2000, scoped, tag = 'output window, operand 0']
    %8 = vsyncpa [#allocation3], 0
    %s9 = scalar_lea.sflag [#allocation3], 1
    %10 = vsyncpa %s9, 0
    %11 = vsyncpa [#allocation4], 0
    %s12 = scalar_lea.sflag [#allocation4], 1
    %13 = vsyncpa %s12, 0
    loop: start=0, step=1, limit=4
    $region2: #{tpu_custom_call.1} parent=1 // loop_pre_header
      _
    $region3: #{tpu_custom_call.1} parent=1 // loop_header
      %s15 = sphi 0, %s19
      %p16 = scmp.ge.s32.totalorder %s15, 4
      %s25 = sphi 0, %s27
      %s28 = sphi 0, %s25
      %s29 = sphi 0, %s28
      %s45 = sphi 0, %s29
      %s49 = sphi 0, %s49
      %s51 = sphi 0, %s49
      %s52 = sphi 0, %s51
      %s66 = sphi 0, %s52
      %s70 = sphi 0, %s70
      %s72 = sphi 0, %s70
      %s73 = sphi 0, %s72
      %s87 = sphi 0, %s73
      %s93 = sphi 0, %s95
      %s96 = sphi 0, %s93
      %s97 = sphi 0, %s96
      %s113 = sphi 0, %s97
    $region4: #{tpu_custom_call.1} parent=1 // loop_header_branch
      %18 = sbr.rel (%p16) target = $region8
    $region5: #{tpu_custom_call.1} parent=1 // loop_body
      %s20 = ssub.s32 %s15, 1
      %s21 = ssub.s32 %s15, 2
      %s22 = sadd.s32 %s15, 1
      %s23 = ssub.s32 %s15, %s22
      %p24 = scmp.eq.s32.totalorder %s23, 0
      %s26 = sadd.s32 %s25, 1
      %s27 = scalar_select %p24, %s25, %s26
      %p30 = pneg %p24
      %p31 = scmp.eq.s32.totalorder %s15, 1
      %p32 = por %p30, %p31
      %p33 = scmp.ne.s32.totalorder %s25, %s28
      %p34 = scmp.eq.s32.totalorder %s15, 0
      %p35 = por %p33, %p34
      %p36 = scmp.ne.s32.totalorder %s25, %s28
      %p37 = scmp.eq.s32.totalorder %s20, 1
      %p38 = por %p36, %p37
      %p39 = scmp.ne.s32.totalorder %s28, %s29
      %p40 = scmp.eq.s32.totalorder %s20, 0
      %p41 = por %p39, %p40
      %p42 = scmp.ne.s32.totalorder %s28, %s29
      %p43 = scmp.eq.s32.totalorder %s21, 1
      %p44 = por %p42, %p43
      %p46 = scmp.ne.s32.totalorder %s29, %s45
      %p47 = scmp.eq.s32.totalorder %s21, 0
      %p48 = por %p46, %p47
      %s50 = sadd.s32 %s49, 1
      %p53 = scmp.eq.s32.totalorder %s15, 1
      %p54 = scmp.ne.s32.totalorder %s49, %s51
      %p55 = scmp.eq.s32.totalorder %s15, 0
      %p56 = por %p54, %p55
      %p57 = scmp.ne.s32.totalorder %s49, %s51
      %p58 = scmp.eq.s32.totalorder %s20, 1
      %p59 = por %p57, %p58
      %p60 = scmp.ne.s32.totalorder %s51, %s52
      %p61 = scmp.eq.s32.totalorder %s20, 0
      %p62 = por %p60, %p61
      %p63 = scmp.ne.s32.totalorder %s51, %s52
      %p64 = scmp.eq.s32.totalorder %s21, 1
      %p65 = por %p63, %p64
      %p67 = scmp.ne.s32.totalorder %s52, %s66
      %p68 = scmp.eq.s32.totalorder %s21, 0
      %p69 = por %p67, %p68
      %s71 = sadd.s32 %s70, 1
      %p74 = scmp.eq.s32.totalorder %s15, 1
      %p75 = scmp.ne.s32.totalorder %s70, %s72
      %p76 = scmp.eq.s32.totalorder %s15, 0
      %p77 = por %p75, %p76
      %p78 = scmp.ne.s32.totalorder %s70, %s72
      %p79 = scmp.eq.s32.totalorder %s20, 1
      %p80 = por %p78, %p79
      %p81 = scmp.ne.s32.totalorder %s72, %s73
      %p82 = scmp.eq.s32.totalorder %s20, 0
      %p83 = por %p81, %p82
      %p84 = scmp.ne.s32.totalorder %s72, %s73
      %p85 = scmp.eq.s32.totalorder %s21, 1
      %p86 = por %p84, %p85
      %p88 = scmp.ne.s32.totalorder %s73, %s87
      %p89 = scmp.eq.s32.totalorder %s21, 0
      %p90 = por %p88, %p89
      %s91 = ssub.s32 %s15, %s22
      %p92 = scmp.eq.s32.totalorder %s91, 0
      %s94 = sadd.s32 %s93, 1
      %s95 = scalar_select %p92, %s93, %s94
      %p98 = pneg %p92
      %p99 = scmp.eq.s32.totalorder %s15, 1
      %p100 = por %p98, %p99
      %p101 = scmp.ne.s32.totalorder %s93, %s96
      %p102 = scmp.eq.s32.totalorder %s15, 0
      %p103 = por %p101, %p102
      %p104 = scmp.ne.s32.totalorder %s93, %s96
      %p105 = scmp.eq.s32.totalorder %s20, 1
      %p106 = por %p104, %p105
      %p107 = scmp.ne.s32.totalorder %s96, %s97
      %p108 = scmp.eq.s32.totalorder %s20, 0
      %p109 = por %p107, %p108
      %p110 = scmp.ne.s32.totalorder %s96, %s97
      %p111 = scmp.eq.s32.totalorder %s21, 1
      %p112 = por %p110, %p111
      %p114 = scmp.ne.s32.totalorder %s97, %s113
      %p115 = scmp.eq.s32.totalorder %s21, 0
      %p116 = por %p114, %p115
      %p117 = scmp.le.s32.totalorder 1, %s15
      %p118 = scmp.lt.s32.totalorder %s15, 3
      %p119 = pnand %p117, %p118
      %p120 = pneg %p119
      // Predicated region
      $region9: #{tpu_custom_call.1} parent=5 // pred_check
        _
      $region10: #{tpu_custom_call.1} parent=5 // pred_check_branch
        %122 = sbr.rel (%p119) target = $region12
      $region11: #{tpu_custom_call.1} parent=5 // pred_region
        %s123 = ssub.s32 %s15, 1
        // Predicated region
        $region13: #{tpu_custom_call.1} parent=11 // pred_check
          %p124 = pneg %p62
        $region14: #{tpu_custom_call.1} parent=11 // pred_check_branch
          %126 = sbr.rel (%p124) target = $region16
        $region15: #{tpu_custom_call.1} parent=11 // pred_region
          _
        $region16: #{tpu_custom_call.1} parent=11 // pred_fallthru
          _
        // Predicated region
        $region17: #{tpu_custom_call.1} parent=11 // pred_check
          %p127 = pneg %p83
        $region18: #{tpu_custom_call.1} parent=11 // pred_check_branch
          %129 = sbr.rel (%p127) target = $region20
        $region19: #{tpu_custom_call.1} parent=11 // pred_region
          _
        $region20: #{tpu_custom_call.1} parent=11 // pred_fallthru
          _
      $region12: #{tpu_custom_call.1} parent=5 // pred_fallthru
        _
      %p130 = scmp.lt.s32.totalorder %s15, 2
      // Predicated region
      $region21: #{tpu_custom_call.1} parent=5 // pred_check
        %p131 = pneg %p130
      $region22: #{tpu_custom_call.1} parent=5 // pred_check_branch
        %133 = sbr.rel (%p131) target = $region24
      $region23: #{tpu_custom_call.1} parent=5 // pred_region
        // Predicated region
        $region25: #{tpu_custom_call.1} parent=23 // pred_check
          %p134 = pneg %p35
        $region26: #{tpu_custom_call.1} parent=23 // pred_check_branch
          %136 = sbr.rel (%p134) target = $region28
        $region27: #{tpu_custom_call.1} parent=23 // pred_region
          %s137 = sand.u32 %s25, 1
          %s138 = scalar_lea.sflag [#allocation3], %s137
          %s139 = sand.u32 %s25, 1
          %s140 = smul.addr %s139, 8
          %s141 = scalar_lea.vmem [#allocation2], %s140
          %s143 = ssub.s32 128, 128
          %144 = vsyncadd %s138, %s143
          %s145 = smul.addr %s15, 2
          %s146 = smul.addr %s145, 64
          %s147 = scalar_lea.hbm %s0, %s146
          %s149 = sshll.u32 %s141, 4
          %s150 = int_to_ptr.vmem [resolvable:$true] %s149
          %152 = dma.hbm_to_vmem [thread:$0]  %s147, 128, %s150, %s138
        $region28: #{tpu_custom_call.1} parent=23 // pred_fallthru
          _
      $region24: #{tpu_custom_call.1} parent=5 // pred_fallthru
        _
      %p153 = scmp.le.s32.totalorder 1, %s15
      %p154 = scmp.lt.s32.totalorder %s15, 3
      %p155 = pnand %p153, %p154
      %p156 = pneg %p155
      // Predicated region
      $region29: #{tpu_custom_call.1} parent=5 // pred_check
        _
      $region30: #{tpu_custom_call.1} parent=5 // pred_check_branch
        %158 = sbr.rel (%p155) target = $region32
      $region31: #{tpu_custom_call.1} parent=5 // pred_region
        %s159 = ssub.s32 %s15, 1
        %s160 = sand.u32 %s28, 1
        %s161 = scalar_lea.sflag [#allocation3], %s160
        %s162 = sand.u32 %s28, 1
        %s163 = smul.addr %s162, 8
        %s164 = scalar_lea.vmem [#allocation2], %s163
        // Predicated region
        $region33: #{tpu_custom_call.1} parent=31 // pred_check
          %p165 = pneg %p41
        $region34: #{tpu_custom_call.1} parent=31 // pred_check_branch
          %167 = sbr.rel (%p165) target = $region36
        $region35: #{tpu_custom_call.1} parent=31 // pred_region
          %168 = dma.done %s161, 128
        $region36: #{tpu_custom_call.1} parent=31 // pred_fallthru
          _
        %s169 = sand.u32 %s28, 1
        %s170 = scalar_lea.sflag [#allocation3], %s169
        %s171 = sand.u32 %s28, 1
        %s172 = smul.addr %s171, 8
        %s173 = scalar_lea.vmem [#allocation2], %s172
        %p174 = pneg %p41
        %p175 = pneg %p38
        %p176 = pneg %p62
        %p177 = pneg %p59
        %p178 = pneg %p83
        %p179 = pneg %p80
        %p180 = pneg %p109
        %p181 = pneg %p106
        %s182 = sand.u32 %s96, 1
        %s183 = scalar_lea.sflag [#allocation4], %s182
        %s184 = sand.u32 %s96, 1
        %s185 = smul.addr %s184, 8
        %s186 = scalar_lea.vmem [#allocation5], %s185
        %v187 = vld [vmem:[%s164] sm:$0xff]
        %v189 = vcombine.high %v187, %v187
        %vm191 = vcmask 1043456
        %v192 = vsel %vm191, %v187, 0.0
        %v193 = vsel %vm191, %v189, 0.0
        %v194 = vadd.f32 %v192, %v193
        %195 = vadd.xlane.f32.xlu0 %v194
        %v196 = vpop.xlane.xlu0 %195
        %v197 = vmul.f32 %v196, 0.00390625
        %v198 = vld [vmem:[%s1] sm:$0x3]
        %v199 = vld [vmem:[%s2] sm:$0xf]
        %v201 = vlaneseq
        %v202 = vand.u32 %v201, 127
        %v203 = vlaneseq
        %v204 = vshrl.u32 %v203, 7
        %v205 = vsub.s32 %v202, %v204
        %v206 = vrot.slane %v197, %v205
        %v208 = vmul.f32 %v198, %v206
        %vm209 = vcmask 25600
        %v210 = vsel %vm209, %v208, 0.0
        %211 = vadd.xlane.f32.xlu0 %v210
        %v212 = vpop.xlane.xlu0 %211
        %v214 = vlaneseq
        %v215 = vshrl.u32 %v214, 7
        %v216 = vsub.s32 %v202, %v215
        %v217 = vrot.slane %v212, %v216
        %vm218 = vcmask 1042434
        %v219 = vsel %vm218, %v217, %v217
        %vm220 = vcmask 1043459
        %v221 = vsel %vm220, %v217, %v219
        %v223 = vmul.f32 %v199, %v221
        %vm224 = vcmask 11264
        %v225 = vsel %vm224, %v223, 0.0
        %226 = vadd.xlane.f32.xlu0 %v225
        %v227 = vpop.xlane.xlu0 %226
        %v228 = vxor.u32 %v227, 2147483648
        %v229 = vmul.f32 %v228, 1.442695
        %v230 = vpow.pop %v229
        %v231 = vadd.f32 %v230, 1.0
        %v232 = vrcp.pop %v231
        %v233 = vmul.f32 1.0, %v232
        %v236 = vunpack.c.l.s4 839922192
        %v237 = vunpack.c.0.s8 %v236
        %v238 = vlaneseq
        %v239 = vshrl.u32 %v238, 7
        %v240 = vsub.s32 %v237, %v239
        %v241 = vrot.slane %v233, %v240
        %v243 = vmul.f32 %v187, %v241
        %244 = vst [vmem:[%s186] sm:$0xff] %v243
        %s245 = sand.u32 %s96, 1
        %s246 = scalar_lea.sflag [#allocation4], %s245
        %s247 = sand.u32 %s96, 1
        %s248 = smul.addr %s247, 8
        %s249 = scalar_lea.vmem [#allocation5], %s248
        // Predicated region
        $region37: #{tpu_custom_call.1} parent=31 // pred_check
          %p250 = pneg %p106
        $region38: #{tpu_custom_call.1} parent=31 // pred_check_branch
          %252 = sbr.rel (%p250) target = $region40
        $region39: #{tpu_custom_call.1} parent=31 // pred_region
          %s254 = ssub.s32 128, 128
          %255 = vsyncadd %s246, %s254
          %s256 = smul.addr %s20, 2
          %s257 = smul.addr %s256, 64
          %s258 = scalar_lea.hbm %s3, %s257
          %s260 = sshll.u32 %s249, 4
          %s261 = int_to_ptr.vmem [resolvable:$true] %s260
          %263 = dma.vmem_to_hbm [thread:$0]  %s261, 128, %s258, %s246
        $region40: #{tpu_custom_call.1} parent=31 // pred_fallthru
          _
      $region32: #{tpu_custom_call.1} parent=5 // pred_fallthru
        _
      %p264 = scmp.le.s32.totalorder 2, %s15
      // Predicated region
      $region41: #{tpu_custom_call.1} parent=5 // pred_check
        %p265 = pneg %p264
      $region42: #{tpu_custom_call.1} parent=5 // pred_check_branch
        %267 = sbr.rel (%p265) target = $region44
      $region43: #{tpu_custom_call.1} parent=5 // pred_region
        %s268 = ssub.s32 %s15, 2
        // Predicated region
        $region45: #{tpu_custom_call.1} parent=43 // pred_check
          %p269 = pneg %p112
        $region46: #{tpu_custom_call.1} parent=43 // pred_check_branch
          %271 = sbr.rel (%p269) target = $region48
        $region47: #{tpu_custom_call.1} parent=43 // pred_region
          %s272 = sand.u32 %s97, 1
          %s273 = scalar_lea.sflag [#allocation4], %s272
          %s274 = sand.u32 %s97, 1
          %s275 = smul.addr %s274, 8
          %s276 = scalar_lea.vmem [#allocation5], %s275
          %277 = dma.done %s273, 128
        $region48: #{tpu_custom_call.1} parent=43 // pred_fallthru
          _
      $region44: #{tpu_custom_call.1} parent=5 // pred_fallthru
        _
    $region6: #{tpu_custom_call.1} parent=1 // loop_footer
      %s19 = sadd.s32 1, %s15
    $region7: #{tpu_custom_call.1} parent=1 // loop_footer_branch
      %14 = sbr.rel target = $region3
    $region8: #{tpu_custom_call.1} parent=1 // loop_exit
      _
    %278 = vsyncpa [#allocation3], 1
    %s279 = scalar_lea.sflag [#allocation3], 1
    %280 = vsyncpa %s279, 1
    %281 = vsyncpa [#allocation4], 1
    %s282 = scalar_lea.sflag [#allocation4], 1
    %283 = vsyncpa %s282, 1

</llo_original>
